<compile_context>
chip_gen: v7x
topology: tpu7x:2x2x1
jax: 0.10.0
libtpu: 0.0.40
codegen_flags: <defaults>
</compile_context>

<pallas_src>
import jax
import jax.numpy as jnp
from jax.experimental import pallas as pl
from jax.experimental.pallas import tpu as pltpu


def _fuse_add_kernel(x_ref, d_ref, o_ref):
    # Elementwise fusion hot path: out = x + dep on the current VMEM tile.
    # DMA-bound; no micro-optimization of the body is useful.
    o_ref[...] = x_ref[...] + d_ref[...]


def _sublane_min(dtype) -> int:
    # Minimum sublane tile per dtype packing: f32 -> 8, bf16 -> 16, int8/fp8 -> 32.
    itemsize = jnp.dtype(dtype).itemsize
    return {4: 8, 2: 16, 1: 32}.get(itemsize, 8)


def _vmem_budgets():
    """Generation-aware VMEM budgets.

    per-operand tile ~ vmem/12; 3 operands x 2 pipeline buffers -> ~vmem/2
    resident; vmem_limit = resident + 8 MiB compiler-scratch headroom, capped
    at 3/4 of physical VMEM.  (v5e/v6e 128 MiB -> ~10.6 MiB tiles, 72 MiB
    limit; v7x 64 MiB/TC -> ~5.3 MiB tiles, 40 MiB limit.)
    """
    try:
        vmem = int(getattr(pltpu.get_tpu_info(), "vmem_capacity_bytes", 0)) or (128 << 20)
    except Exception:
        vmem = 128 << 20
    per_operand = max(1 << 20, vmem // 12)
    vmem_limit = min(6 * per_operand + (8 << 20), (3 * vmem) // 4)
    return per_operand, vmem_limit


def _pick_width(main_elems: int) -> int:
    # Largest "nice" lane-dense width dividing the slab; main_elems % 128 == 0.
    for n in (2048, 1024, 512, 256, 128):
        if main_elems % n == 0:
            return n
    return 128  # unreachable: main_elems is always a multiple of 128


def _round_up(v: int, m: int) -> int:
    return ((v + m - 1) // m) * m


def _lane_dense_add(x2, d2, itemsize, sub, per_operand, vmem_limit):
    """out = x2 + d2 on a lane-dense (M, N) slab (N % 128 == 0)."""
    M, N = x2.shape
    slab_bytes = M * N * itemsize

    if slab_bytes <= (512 << 10):
        # Small-tensor fast path: one grid-free block; all three operands
        # comfortably resident in VMEM, no per-step pipeline overhead.
        return pl.pallas_call(
            _fuse_add_kernel,
            out_shape=jax.ShapeDtypeStruct((M, N), x2.dtype),
            input_output_aliases={0: 0},
            compiler_params=pltpu.CompilerParams(
                vmem_limit_bytes=vmem_limit,
            ),
        )(x2, d2)

    # Tiled path: full-width blocks (contiguous DMA), 1-D "parallel" grid.
    tm_budget = max(sub, (per_operand // (N * itemsize)) // sub * sub)
    # Guarantee >= 2 blocks for v7x megacore when the slab allows it.
    tm_split = max(sub, _round_up((M + 1) // 2, sub))
    tm = min(tm_budget, tm_split)
    if tm >= M:
        tm = M  # block == full dim is always legal

    grid = (pl.cdiv(M, tm),)

    return pl.pallas_call(
        _fuse_add_kernel,
        out_shape=jax.ShapeDtypeStruct((M, N), x2.dtype),
        grid=grid,
        in_specs=[
            pl.BlockSpec((tm, N), lambda i: (i, 0)),
            pl.BlockSpec((tm, N), lambda i: (i, 0)),
        ],
        out_specs=pl.BlockSpec((tm, N), lambda i: (i, 0)),
        input_output_aliases={0: 0},
        compiler_params=pltpu.CompilerParams(
            dimension_semantics=("parallel",),
            vmem_limit_bytes=vmem_limit,
        ),
    )(x2, d2)


def fuse_block_forward(x, dep, *, mmf_att=None):
    """Pallas implementation of Fuse_Block.forward for mmf_att=None.

    Args:
      x:   jnp.ndarray, NCHW [B, C, H, W]
      dep: jnp.ndarray, NCHW [B, C, H, W] (same shape/dtype as x)

    Returns:
      (out, d) with out = x + dep and d = dep, matching the PyTorch module.
    """
    assert mmf_att is None, "Only the mmf_att=None path is implemented."
    assert x.shape == dep.shape and x.dtype == dep.dtype

    orig_shape = x.shape
    total = int(x.size)
    itemsize = jnp.dtype(x.dtype).itemsize
    sub = _sublane_min(x.dtype)
    per_operand, vmem_limit = _vmem_budgets()

    if total < 128:
        # Degenerate tiny input: no lane-dense slab exists; let XLA fuse the add.
        return x + dep, dep

    main = (total // 128) * 128
    tail = total - main

    if tail == 0:
        N = _pick_width(main)
        M = main // N
        out2 = _lane_dense_add(x.reshape(M, N), dep.reshape(M, N),
                               itemsize, sub, per_operand, vmem_limit)
        return out2.reshape(orig_shape), dep

    # Ragged case: kernel handles the lane-dense main slab (unmasked full-lane
    # stores for 99.9%+ of the data); the <128-element tail is a plain JAX add.
    xf = x.reshape(-1)
    df = dep.reshape(-1)
    N = _pick_width(main)
    M = main // N
    out_main = _lane_dense_add(xf[:main].reshape(M, N), df[:main].reshape(M, N),
                               itemsize, sub, per_operand, vmem_limit)
    out_tail = xf[main:] + df[main:]
    out = jnp.concatenate([out_main.reshape(-1), out_tail]).reshape(orig_shape)
    return out, dep


if __name__ == "__main__":
    key = jax.random.PRNGKey(0)
    kx, kd = jax.random.split(key)

    B, C, H, W = 2, 4, 16, 16  # small NCHW shapes consistent with the module
    x = jax.random.normal(kx, (B, C, H, W), dtype=jnp.float32)
    dep = jax.random.normal(kd, (B, C, H, W), dtype=jnp.float32)

    out, d = fuse_block_forward(x, dep, mmf_att=None)
    out = jax.block_until_ready(out)
    d = jax.block_until_ready(d)

    # Sanity check against the reference semantics (out = x + dep, d = dep).
    assert out.shape == (B, C, H, W)
    assert jnp.allclose(out, x + dep, atol=1e-6)
    assert jnp.array_equal(d, dep)

    print("KERNEL_OK")
</pallas_src>

<mosaic_0001>
module attributes {stable_mosaic.version = 11 : i64} {
  func.func @_fuse_add_kernel(%arg0: memref<1x2048xf32, #tpu.memory_space<vmem>>, %arg1: memref<1x2048xf32, #tpu.memory_space<vmem>>, %arg2: memref<1x2048xf32, #tpu.memory_space<vmem>>) attributes {dimension_semantics = [], scalar_prefetch = 0 : i64, scratch_operands = 0 : i64, tpu.core_type = #tpu.core_type<tc>} {
    %c0 = arith.constant 0 : index
    %c0_0 = arith.constant 0 : index
    %0 = vector.load %arg0[%c0, %c0_0] : memref<1x2048xf32, #tpu.memory_space<vmem>>, vector<1x2048xf32>
    %c0_1 = arith.constant 0 : index
    %c0_2 = arith.constant 0 : index
    %1 = vector.load %arg1[%c0_1, %c0_2] : memref<1x2048xf32, #tpu.memory_space<vmem>>, vector<1x2048xf32>
    %2 = arith.addf %0, %1 : vector<1x2048xf32>
    %c0_3 = arith.constant 0 : index
    %c0_4 = arith.constant 0 : index
    %3 = vector.load %arg2[%c0_3, %c0_4] : memref<1x2048xf32, #tpu.memory_space<vmem>>, vector<1x2048xf32>
    tpu.vector_store %arg2[%c0_3, %c0_4], %2 {strides = array<i32>} : memref<1x2048xf32, #tpu.memory_space<vmem>>, vector<1x2048xf32>,
    return
  }
}

</mosaic_0001>

<llo_original>
// kernel: tpu_custom_call.1
$region0: #{tpu_custom_call.1}
  #allocation0 [shape = 'u32[]', space=smem, size = 0x4, offset = 0x4, fixed_abs, tag = 'smem constant byte address 0x4 - core index']
  #allocation1 [shape = 'u32[144,128]{1,0:T(1,128)}', space=vmem, size = 0x12000, scoped, tag = 'internal scratch']
  %s0 = inlined_call_operand.hbm [shape: f32[1,2048], index: 0, kind: input, shape index: {}, may-alias: {0,2}]
  %s1 = inlined_call_operand.hbm [shape: f32[1,2048], index: 1, kind: input, shape index: {}]
  %s2 = inlined_call_operand.hbm [shape: f32[1,2048], index: 2, kind: output, shape index: {}, may-alias: {0,2}]
  %s3 = sld [smem:[#allocation0]]
  $region26: #{tpu_custom_call.1} parent=0
    _
  %s5 = ssub.s32 1, %s3
  %s6 = scalar_select 0, %s5, %s3
  $region1: #{tpu_custom_call.1} parent=0
    #allocation2 [shape = 'u8[8192]{0}', space=vmem, size = 0x2000, scoped, tag = 'input window, operand 0, single buffered']
    #allocation3 [shape = 's32[1]{0}', space=sflag, size = 0x4, scoped, tag = 'scoped memory for tpu_custom_call.1']
    #allocation4 [shape = 's32[1]{0}', space=sflag, size = 0x4, scoped, tag = 'scoped memory for tpu_custom_call.1']
    #allocation5 [shape = 'u8[8192]{0}', space=vmem, size = 0x2000, scoped, tag = 'input window, operand 1, single buffered']
    #allocation6 [shape = 's32[1]{0}', space=sflag, size = 0x4, scoped, tag = 'scoped memory for tpu_custom_call.1']
    #allocation7 [shape = 'u8[8192]{0}', space=vmem, size = 0x2000, scoped, tag = 'output window, operand 0, single buffered']
    %7 = vsyncpa [#allocation3], 0
    %8 = vsyncpa [#allocation6], 0
    %9 = vsyncpa [#allocation4], 0
    // Predicated region
    $region2: #{tpu_custom_call.1} parent=1 // pred_check
      _
    $region3: #{tpu_custom_call.1} parent=1 // pred_check_branch
      %11 = sbr.rel (0) target = $region5
    $region4: #{tpu_custom_call.1} parent=1 // pred_region
      %s13 = ssub.s32 256, 256
      %14 = vsyncadd [#allocation3], %s13
      %s16 = sshll.u32 [#allocation2], 4
      %s17 = int_to_ptr.vmem [resolvable:$true] %s16
      %19 = dma.hbm_to_vmem [thread:$0]  %s0, 256, %s17, [#allocation3]
    $region5: #{tpu_custom_call.1} parent=1 // pred_fallthru
      _
    // Predicated region
    $region6: #{tpu_custom_call.1} parent=1 // pred_check
      _
    $region7: #{tpu_custom_call.1} parent=1 // pred_check_branch
      %21 = sbr.rel (0) target = $region9
    $region8: #{tpu_custom_call.1} parent=1 // pred_region
      %s23 = ssub.s32 256, 256
      %24 = vsyncadd [#allocation6], %s23
      %s26 = sshll.u32 [#allocation5], 4
      %s27 = int_to_ptr.vmem [resolvable:$true] %s26
      %29 = dma.hbm_to_vmem [thread:$0]  %s1, 256, %s27, [#allocation6]
    $region9: #{tpu_custom_call.1} parent=1 // pred_fallthru
      _
    // Predicated region
    $region10: #{tpu_custom_call.1} parent=1 // pred_check
      _
    $region11: #{tpu_custom_call.1} parent=1 // pred_check_branch
      %31 = sbr.rel (0) target = $region13
    $region12: #{tpu_custom_call.1} parent=1 // pred_region
      %32 = dma.done [#allocation3], 256
    $region13: #{tpu_custom_call.1} parent=1 // pred_fallthru
      _
    // Predicated region
    $region14: #{tpu_custom_call.1} parent=1 // pred_check
      _
    $region15: #{tpu_custom_call.1} parent=1 // pred_check_branch
      %34 = sbr.rel (0) target = $region17
    $region16: #{tpu_custom_call.1} parent=1 // pred_region
      %35 = dma.done [#allocation6], 256
    $region17: #{tpu_custom_call.1} parent=1 // pred_fallthru
      _
    %v36 = vld [vmem:[#allocation2] sm:$0xff]
    %v37 = vld [vmem:[#allocation2 + $0x8] sm:$0xff]
    %v38 = vld [vmem:[#allocation5] sm:$0xff]
    %v39 = vld [vmem:[#allocation5 + $0x8] sm:$0xff]
    %v40 = vadd.f32 %v36, %v38
    %v41 = vadd.f32 %v37, %v39
    %42 = vst [vmem:[#allocation7] sm:$0xff] %v40
    %43 = vst [vmem:[#allocation7 + $0x8] sm:$0xff] %v41
    // Predicated region
    $region18: #{tpu_custom_call.1} parent=1 // pred_check
      _
    $region19: #{tpu_custom_call.1} parent=1 // pred_check_branch
      %45 = sbr.rel (0) target = $region21
    $region20: #{tpu_custom_call.1} parent=1 // pred_region
      %s47 = ssub.s32 256, 256
      %48 = vsyncadd [#allocation4], %s47
      %s50 = sshll.u32 [#allocation7], 4
      %s51 = int_to_ptr.vmem [resolvable:$true] %s50
      %53 = dma.vmem_to_hbm [thread:$0]  %s51, 256, %s2, [#allocation4]
    $region21: #{tpu_custom_call.1} parent=1 // pred_fallthru
      _
    // Predicated region
    $region22: #{tpu_custom_call.1} parent=1 // pred_check
      _
    $region23: #{tpu_custom_call.1} parent=1 // pred_check_branch
      %55 = sbr.rel (0) target = $region25
    $region24: #{tpu_custom_call.1} parent=1 // pred_region
      %56 = dma.done [#allocation4], 256
    $region25: #{tpu_custom_call.1} parent=1 // pred_fallthru
      _
    %57 = vsyncpa [#allocation3], 1
    %58 = vsyncpa [#allocation6], 1
    %59 = vsyncpa [#allocation4], 1

</llo_original>
